<compile_context>
chip_gen: v7x
topology: tpu7x:2x2x1
jax: 0.10.0
libtpu: 0.0.40
codegen_flags: <defaults>
</compile_context>

<pallas_src>
import jax
import jax.numpy as jnp
from jax.experimental import pallas as pl
from jax.experimental.pallas import tpu as pltpu


def _round_up(n, m):
    return ((n + m - 1) // m) * m


def policy_kernel(x_ref, w1_ref, b1_ref, w2_ref, b2_ref, w3d_ref, b3d_ref, o_ref):
    x = x_ref[...]                                                     # (TB, F)

    # fc1 + ReLU   (dropout p=0.5 is identity in eval mode)
    h1 = jnp.dot(x, w1_ref[...], preferred_element_type=jnp.float32) + b1_ref[...]
    h1 = jnp.maximum(h1, 0.0)                                          # (TB, 128)

    # fc2 + ReLU   (dropout p=0.3 is identity in eval mode)
    h2 = jnp.dot(h1, w2_ref[...], preferred_element_type=jnp.float32) + b2_ref[...]
    h2 = jnp.maximum(h2, 0.0)                                          # (TB, 128)

    # fc3 + 2-way softmax, expressed as a logit-difference sigmoid:
    #   softmax([l0, l1]) == [1 - sigmoid(l1-l0), sigmoid(l1-l0)]
    d = jnp.dot(h2, w3d_ref[...], preferred_element_type=jnp.float32) + b3d_ref[...]  # (TB, 1)
    p1 = pl.reciprocal(1.0 + jnp.exp(-d), approx=True)                 # (TB, 1)

    lane = jax.lax.broadcasted_iota(jnp.int32, o_ref.shape, dimension=1)  # (TB, 2)
    o_ref[...] = jnp.where(lane == 1, p1, 1.0 - p1).astype(o_ref.dtype)


def fuse_fc3(w3, b3):
    """Fuse the 2-column fc3 into a single logit-difference column (do once)."""
    w3d = w3[:, 1:2] - w3[:, 0:1]   # (H, 1)
    b3d = b3[:, 1:2] - b3[:, 0:1]   # (1, 1)
    return w3d, b3d


def policy_forward(x, fused_params, block_b=512):
    """x: (B, num_features) float32. Returns softmax action probs (B, 2).

    fused_params = (w1, b1, w2, b2, w3_diff, b3_diff)  — see fuse_fc3().
    """
    w1, b1, w2, b2, w3d, b3d = fused_params
    B, F = x.shape
    H = w1.shape[1]

    # Batch tile: multiple of 8 (sublane), capped by block_b.  Pad B so the
    # grid divides evenly; padded rows are sliced off at the end.
    block_b = _round_up(block_b, 8)
    TB = min(block_b, _round_up(B, 8))
    B_pad = _round_up(B, TB)
    if B_pad != B:
        x = jnp.pad(x, ((0, B_pad - B), (0, 0)))

    grid = (B_pad // TB,)

    out = pl.pallas_call(
        policy_kernel,
        out_shape=jax.ShapeDtypeStruct((B_pad, 2), jnp.float32),
        grid=grid,
        in_specs=[
            # Activations: tiled along the batch axis (pipelined by Pallas).
            pl.BlockSpec((TB, F), lambda i: (i, 0)),
            # Weights / biases: full-array blocks, constant index_map -> VMEM
            # resident across all grid steps (no per-step re-DMA).
            pl.BlockSpec((F, H), lambda i: (0, 0)),    # w1
            pl.BlockSpec((1, H), lambda i: (0, 0)),    # b1
            pl.BlockSpec((H, H), lambda i: (0, 0)),    # w2
            pl.BlockSpec((1, H), lambda i: (0, 0)),    # b2
            pl.BlockSpec((H, 1), lambda i: (0, 0)),    # w3 diff column
            pl.BlockSpec((1, 1), lambda i: (0, 0)),    # b3 diff
        ],
        out_specs=pl.BlockSpec((TB, 2), lambda i: (i, 0)),
        compiler_params=pltpu.CompilerParams(
            dimension_semantics=("parallel",),   # shards batch over v7x's 2 TCs
        ),
    )(x, w1, b1, w2, b2, w3d, b3d)

    return out[:B] if B_pad != B else out


def init_params(key, num_features, hidden=128, num_actions=2):
    """Deterministic init mirroring nn.Linear's U(-1/sqrt(fan_in), 1/sqrt(fan_in)).
    Weights are stored (in_features, out_features); biases as (1, out_features)."""
    k1, k2, k3, k4, k5, k6 = jax.random.split(key, 6)

    def lin(kw, kb, fan_in, fan_out):
        bound = 1.0 / jnp.sqrt(jnp.float32(fan_in))
        w = jax.random.uniform(kw, (fan_in, fan_out), jnp.float32, -bound, bound)
        b = jax.random.uniform(kb, (1, fan_out), jnp.float32, -bound, bound)
        return w, b

    w1, b1 = lin(k1, k2, num_features, hidden)
    w2, b2 = lin(k3, k4, hidden, hidden)
    w3, b3 = lin(k5, k6, hidden, num_actions)
    return (w1, b1, w2, b2, w3, b3)


def policy_reference(x, w1, b1, w2, b2, w3, b3):
    """Pure-JAX reference matching the PyTorch forward (eval mode)."""
    h1 = jnp.maximum(x @ w1 + b1, 0.0)
    h2 = jnp.maximum(h1 @ w2 + b2, 0.0)
    logits = h2 @ w3 + b3
    return jax.nn.softmax(logits, axis=1)


if __name__ == "__main__":
    num_features = 4   # CartPole-v1 observation_space.shape[0]
    batch = 256        # batched observations (vectorized envs / trajectory)

    key = jax.random.PRNGKey(0)
    kx, kp = jax.random.split(key)
    x = jax.random.normal(kx, (batch, num_features), dtype=jnp.float32)

    params = init_params(kp, num_features)
    w1, b1, w2, b2, w3, b3 = params
    fused = (w1, b1, w2, b2) + fuse_fc3(w3, b3)   # fuse fc3 once in the wrapper

    # Batched call: grid=(2,) with TB=128 — weights stay VMEM-resident, x/out
    # tiles are pipelined, batch axis parallel across v7x cores.
    probs = policy_forward(x, fused, block_b=128)
    jax.block_until_ready(probs)

    ref = policy_reference(x, *params)
    assert probs.shape == (batch, 2)
    row_sums = jnp.sum(probs, axis=1)
    assert bool(jnp.all(jnp.abs(row_sums - 1.0) < 1e-5))
    assert bool(jnp.max(jnp.abs(probs - ref)) < 2e-3)

    # Tiny (per-env-step style) batch also works via padding to the sublane tile.
    x_small = x[:5]
    probs_small = policy_forward(x_small, fused, block_b=128)
    jax.block_until_ready(probs_small)
    assert probs_small.shape == (5, 2)
    assert bool(jnp.max(jnp.abs(probs_small - ref[:5])) < 2e-3)

    print("KERNEL_OK")
</pallas_src>

<mosaic_0001>
module attributes {stable_mosaic.version = 11 : i64} {
  func.func @policy_kernel(%arg0: i32, %arg1: memref<128x4xf32, #tpu.memory_space<vmem>>, %arg2: memref<4x128xf32, #tpu.memory_space<vmem>>, %arg3: memref<1x128xf32, #tpu.memory_space<vmem>>, %arg4: memref<128x128xf32, #tpu.memory_space<vmem>>, %arg5: memref<1x128xf32, #tpu.memory_space<vmem>>, %arg6: memref<128x1xf32, #tpu.memory_space<vmem>>, %arg7: memref<1x1xf32, #tpu.memory_space<vmem>>, %arg8: memref<128x2xf32, #tpu.memory_space<vmem>>) attributes {dimension_semantics = [#tpu.dimension_semantics<parallel>], iteration_bounds = array<i64: 2>, scalar_prefetch = 0 : i64, scratch_operands = 0 : i64, tpu.core_type = #tpu.core_type<tc>, window_params = [{transform_indices = @transform_0, window_bounds = array<i64: 128, 4>}, {pipeline_mode = #tpu.pipeline_mode<synchronous>, transform_indices = @transform_1, window_bounds = array<i64: 4, 128>}, {pipeline_mode = #tpu.pipeline_mode<synchronous>, transform_indices = @transform_2, window_bounds = array<i64: 1, 128>}, {pipeline_mode = #tpu.pipeline_mode<synchronous>, transform_indices = @transform_3, window_bounds = array<i64: 128, 128>}, {pipeline_mode = #tpu.pipeline_mode<synchronous>, transform_indices = @transform_4, window_bounds = array<i64: 1, 128>}, {pipeline_mode = #tpu.pipeline_mode<synchronous>, transform_indices = @transform_5, window_bounds = array<i64: 128, 1>}, {pipeline_mode = #tpu.pipeline_mode<synchronous>, transform_indices = @transform_6, window_bounds = array<i64: 1, 1>}, {transform_indices = @transform_7, window_bounds = array<i64: 128, 2>}]} {
    %c0 = arith.constant 0 : index
    %c0_0 = arith.constant 0 : index
    %0 = vector.load %arg1[%c0, %c0_0] : memref<128x4xf32, #tpu.memory_space<vmem>>, vector<128x4xf32>
    %c0_1 = arith.constant 0 : index
    %c0_2 = arith.constant 0 : index
    %1 = vector.load %arg2[%c0_1, %c0_2] : memref<4x128xf32, #tpu.memory_space<vmem>>, vector<4x128xf32>
    %cst = arith.constant dense<0.000000e+00> : vector<128x128xf32>
    %2 = tpu.matmul %0, %1, %cst {dimension_numbers = #tpu.dot_dimension_numbers<[1], [0], [0], [1], [0, 0, 1, 1], [], []>} : vector<128x4xf32>, vector<4x128xf32>, vector<128x128xf32> -> vector<128x128xf32>
    %c0_3 = arith.constant 0 : index
    %c0_4 = arith.constant 0 : index
    %3 = vector.load %arg3[%c0_3, %c0_4] : memref<1x128xf32, #tpu.memory_space<vmem>>, vector<1x128xf32>
    %4 = vector.broadcast %3 : vector<1x128xf32> to vector<128x128xf32>
    %5 = arith.addf %2, %4 : vector<128x128xf32>
    %cst_5 = arith.constant 0.000000e+00 : f32
    %6 = vector.broadcast %cst_5 : f32 to vector<128x128xf32>
    %7 = arith.maximumf %5, %6 : vector<128x128xf32>
    %c0_6 = arith.constant 0 : index
    %c0_7 = arith.constant 0 : index
    %8 = vector.load %arg4[%c0_6, %c0_7] : memref<128x128xf32, #tpu.memory_space<vmem>>, vector<128x128xf32>
    %cst_8 = arith.constant dense<0.000000e+00> : vector<128x128xf32>
    %9 = tpu.matmul %7, %8, %cst_8 {dimension_numbers = #tpu.dot_dimension_numbers<[1], [0], [0], [1], [0, 0, 1, 1], [], []>} : vector<128x128xf32>, vector<128x128xf32>, vector<128x128xf32> -> vector<128x128xf32>
    %c0_9 = arith.constant 0 : index
    %c0_10 = arith.constant 0 : index
    %10 = vector.load %arg5[%c0_9, %c0_10] : memref<1x128xf32, #tpu.memory_space<vmem>>, vector<1x128xf32>
    %11 = vector.broadcast %10 : vector<1x128xf32> to vector<128x128xf32>
    %12 = arith.addf %9, %11 : vector<128x128xf32>
    %cst_11 = arith.constant 0.000000e+00 : f32
    %13 = vector.broadcast %cst_11 : f32 to vector<128x128xf32>
    %14 = arith.maximumf %12, %13 : vector<128x128xf32>
    %c0_12 = arith.constant 0 : index
    %c0_13 = arith.constant 0 : index
    %15 = vector.load %arg6[%c0_12, %c0_13] : memref<128x1xf32, #tpu.memory_space<vmem>>, vector<128x1xf32>
    %cst_14 = arith.constant dense<0.000000e+00> : vector<128x1xf32>
    %16 = tpu.matmul %14, %15, %cst_14 {dimension_numbers = #tpu.dot_dimension_numbers<[1], [0], [0], [1], [0, 0, 1, 1], [], []>} : vector<128x128xf32>, vector<128x1xf32>, vector<128x1xf32> -> vector<128x1xf32>
    %c0_15 = arith.constant 0 : index
    %c0_16 = arith.constant 0 : index
    %17 = vector.load %arg7[%c0_15, %c0_16] : memref<1x1xf32, #tpu.memory_space<vmem>>, vector<1x1xf32>
    %18 = vector.broadcast %17 : vector<1x1xf32> to vector<128x1xf32>
    %19 = arith.addf %16, %18 : vector<128x1xf32>
    %cst_17 = arith.constant 0.000000e+00 : f32
    %20 = vector.broadcast %cst_17 : f32 to vector<128x1xf32>
    %21 = arith.subf %20, %19 : vector<128x1xf32>
    %22 = math.exp %21 : vector<128x1xf32>
    %cst_18 = arith.constant 1.000000e+00 : f32
    %23 = vector.broadcast %cst_18 : f32 to vector<128x1xf32>
    %24 = arith.addf %23, %22 : vector<128x1xf32>
    %25 = tpu.reciprocal %24 {approx = true} : vector<128x1xf32> -> vector<128x1xf32>
    %26 = tpu.iota {dimensions = array<i32: 1>} : vector<128x2xi32>
    %c1_i32 = arith.constant 1 : i32
    %27 = vector.broadcast %c1_i32 : i32 to vector<128x2xi32>
    %28 = arith.cmpi eq, %26, %27 : vector<128x2xi32>
    %cst_19 = arith.constant 1.000000e+00 : f32
    %29 = vector.broadcast %cst_19 : f32 to vector<128x1xf32>
    %30 = arith.subf %29, %25 : vector<128x1xf32>
    %31 = vector.shape_cast %25 : vector<128x1xf32> to vector<128x1xf32>
    %32 = vector.broadcast %31 : vector<128x1xf32> to vector<128x2xf32>
    %33 = vector.shape_cast %30 : vector<128x1xf32> to vector<128x1xf32>
    %34 = vector.broadcast %33 : vector<128x1xf32> to vector<128x2xf32>
    %35 = arith.select %28, %32, %34 : vector<128x2xi1>, vector<128x2xf32>
    %c0_20 = arith.constant 0 : index
    %c0_21 = arith.constant 0 : index
    %36 = vector.load %arg8[%c0_20, %c0_21] : memref<128x2xf32, #tpu.memory_space<vmem>>, vector<128x2xf32>
    tpu.vector_store %arg8[%c0_20, %c0_21], %35 {strides = array<i32>} : memref<128x2xf32, #tpu.memory_space<vmem>>, vector<128x2xf32>,
    return
  }
  func.func @transform_0(%arg0: i32) -> (i32, i32) {
    %c0_i32 = arith.constant 0 : i32
    %c0_i32_0 = arith.constant 0 : i32
    return %arg0, %c0_i32 : i32, i32
  }
  func.func @transform_1(%arg0: i32) -> (i32, i32) {
    %c0_i32 = arith.constant 0 : i32
    %c0_i32_0 = arith.constant 0 : i32
    %c0_i32_1 = arith.constant 0 : i32
    return %c0_i32, %c0_i32_0 : i32, i32
  }
  func.func @transform_2(%arg0: i32) -> (i32, i32) {
    %c0_i32 = arith.constant 0 : i32
    %c0_i32_0 = arith.constant 0 : i32
    %c0_i32_1 = arith.constant 0 : i32
    return %c0_i32, %c0_i32_0 : i32, i32
  }
  func.func @transform_3(%arg0: i32) -> (i32, i32) {
    %c0_i32 = arith.constant 0 : i32
    %c0_i32_0 = arith.constant 0 : i32
    %c0_i32_1 = arith.constant 0 : i32
    return %c0_i32, %c0_i32_0 : i32, i32
  }
  func.func @transform_4(%arg0: i32) -> (i32, i32) {
    %c0_i32 = arith.constant 0 : i32
    %c0_i32_0 = arith.constant 0 : i32
    %c0_i32_1 = arith.constant 0 : i32
    return %c0_i32, %c0_i32_0 : i32, i32
  }
  func.func @transform_5(%arg0: i32) -> (i32, i32) {
    %c0_i32 = arith.constant 0 : i32
    %c0_i32_0 = arith.constant 0 : i32
    %c0_i32_1 = arith.constant 0 : i32
    return %c0_i32, %c0_i32_0 : i32, i32
  }
  func.func @transform_6(%arg0: i32) -> (i32, i32) {
    %c0_i32 = arith.constant 0 : i32
    %c0_i32_0 = arith.constant 0 : i32
    %c0_i32_1 = arith.constant 0 : i32
    return %c0_i32, %c0_i32_0 : i32, i32
  }
  func.func @transform_7(%arg0: i32) -> (i32, i32) {
    %c0_i32 = arith.constant 0 : i32
    %c0_i32_0 = arith.constant 0 : i32
    return %arg0, %c0_i32 : i32, i32
  }
}

</mosaic_0001>

<llo_original>
// kernel: tpu_custom_call.1
$region0: #{tpu_custom_call.1}
  #allocation0 [shape = 'u32[]', space=smem, size = 0x4, offset = 0x4, fixed_abs, tag = 'smem constant byte address 0x4 - core index']
  #allocation1 [shape = 'u32[144,128]{1,0:T(1,128)}', space=vmem, size = 0x12000, scoped, tag = 'internal scratch']
  #allocation2 [shape = 'f32[1,1]{1,0:T(1,128)S(1)}', space=vmem, size = 0x200, scoped, tag = 'scoped memory for tpu_custom_call.1']
  %s0 = inlined_call_operand.vmem [shape: f32[256,4], index: 0, kind: input, shape index: {}]
  %s1 = inlined_call_operand.vmem [shape: f32[4,128], index: 1, kind: input, shape index: {}]
  %s2 = inlined_call_operand.vmem [shape: f32[1,128], index: 2, kind: input, shape index: {}]
  %s3 = inlined_call_operand.vmem [shape: f32[128,128], index: 3, kind: input, shape index: {}]
  %s4 = inlined_call_operand.vmem [shape: f32[1,128], index: 4, kind: input, shape index: {}]
  %s5 = inlined_call_operand.vmem [shape: f32[128,1], index: 5, kind: input, shape index: {}]
  %s6 = inlined_call_operand.<no memory space> [shape: f32[1,1], index: 6, kind: input, shape index: {}]
  %s7 = inlined_call_operand.vmem [shape: f32[256,2], index: 7, kind: output, shape index: {}]
  %s8 = sld [smem:[#allocation0]]
  $region61: #{tpu_custom_call.1} parent=0
    _
  %s10 = ssub.s32 1, %s8
  %s11 = scalar_select 0, %s10, %s8
  %v12 = vstv %s6
  %13 = vst [vmem:[#allocation2] sm:$0x1] %v12
  loop: start=0, step=1, limit=4
  $region2: #{tpu_custom_call.1} parent=0 // loop_pre_header
    _
  $region3: #{tpu_custom_call.1} parent=0 // loop_header
    %s15 = sphi 0, %s19
    %p16 = scmp.ge.s32.totalorder %s15, 4
    %s25 = sphi 0, %s27
    %s28 = sphi 0, %s25
    %s29 = sphi 0, %s28
    %s45 = sphi 0, %s29
    %s49 = sphi 0, %s49
    %s51 = sphi 0, %s49
    %s52 = sphi 0, %s51
    %s66 = sphi 0, %s52
    %s70 = sphi 0, %s70
    %s72 = sphi 0, %s70
    %s73 = sphi 0, %s72
    %s87 = sphi 0, %s73
    %s91 = sphi 0, %s91
    %s93 = sphi 0, %s91
    %s94 = sphi 0, %s93
    %s108 = sphi 0, %s94
    %s112 = sphi 0, %s112
    %s114 = sphi 0, %s112
    %s115 = sphi 0, %s114
    %s129 = sphi 0, %s115
    %s133 = sphi 0, %s133
    %s135 = sphi 0, %s133
    %s136 = sphi 0, %s135
    %s150 = sphi 0, %s136
    %s154 = sphi 0, %s154
    %s156 = sphi 0, %s154
    %s157 = sphi 0, %s156
    %s171 = sphi 0, %s157
    %s177 = sphi 0, %s179
    %s180 = sphi 0, %s177
    %s181 = sphi 0, %s180
    %s197 = sphi 0, %s181
  $region4: #{tpu_custom_call.1} parent=0 // loop_header_branch
    %18 = sbr.rel (%p16) target = $region8
  $region5: #{tpu_custom_call.1} parent=0 // loop_body
    %s20 = ssub.s32 %s15, 1
    %s21 = ssub.s32 %s15, 2
    %s22 = sadd.s32 %s15, 1
    %s23 = ssub.s32 %s15, %s22
    %p24 = scmp.eq.s32.totalorder %s23, 0
    %s26 = sadd.s32 %s25, 1
    %s27 = scalar_select %p24, %s25, %s26
    %p30 = pneg %p24
    %p31 = scmp.eq.s32.totalorder %s15, 1
    %p32 = por %p30, %p31
    %p33 = scmp.ne.s32.totalorder %s25, %s28
    %p34 = scmp.eq.s32.totalorder %s15, 0
    %p35 = por %p33, %p34
    %p36 = scmp.ne.s32.totalorder %s25, %s28
    %p37 = scmp.eq.s32.totalorder %s20, 1
    %p38 = por %p36, %p37
    %p39 = scmp.ne.s32.totalorder %s28, %s29
    %p40 = scmp.eq.s32.totalorder %s20, 0
    %p41 = por %p39, %p40
    %p42 = scmp.ne.s32.totalorder %s28, %s29
    %p43 = scmp.eq.s32.totalorder %s21, 1
    %p44 = por %p42, %p43
    %p46 = scmp.ne.s32.totalorder %s29, %s45
    %p47 = scmp.eq.s32.totalorder %s21, 0
    %p48 = por %p46, %p47
    %s50 = sadd.s32 %s49, 1
    %p53 = scmp.eq.s32.totalorder %s15, 1
    %p54 = scmp.ne.s32.totalorder %s49, %s51
    %p55 = scmp.eq.s32.totalorder %s15, 0
    %p56 = por %p54, %p55
    %p57 = scmp.ne.s32.totalorder %s49, %s51
    %p58 = scmp.eq.s32.totalorder %s20, 1
    %p59 = por %p57, %p58
    %p60 = scmp.ne.s32.totalorder %s51, %s52
    %p61 = scmp.eq.s32.totalorder %s20, 0
    %p62 = por %p60, %p61
    %p63 = scmp.ne.s32.totalorder %s51, %s52
    %p64 = scmp.eq.s32.totalorder %s21, 1
    %p65 = por %p63, %p64
    %p67 = scmp.ne.s32.totalorder %s52, %s66
    %p68 = scmp.eq.s32.totalorder %s21, 0
    %p69 = por %p67, %p68
    %s71 = sadd.s32 %s70, 1
    %p74 = scmp.eq.s32.totalorder %s15, 1
    %p75 = scmp.ne.s32.totalorder %s70, %s72
    %p76 = scmp.eq.s32.totalorder %s15, 0
    %p77 = por %p75, %p76
    %p78 = scmp.ne.s32.totalorder %s70, %s72
    %p79 = scmp.eq.s32.totalorder %s20, 1
    %p80 = por %p78, %p79
    %p81 = scmp.ne.s32.totalorder %s72, %s73
    %p82 = scmp.eq.s32.totalorder %s20, 0
    %p83 = por %p81, %p82
    %p84 = scmp.ne.s32.totalorder %s72, %s73
    %p85 = scmp.eq.s32.totalorder %s21, 1
    %p86 = por %p84, %p85
    %p88 = scmp.ne.s32.totalorder %s73, %s87
    %p89 = scmp.eq.s32.totalorder %s21, 0
    %p90 = por %p88, %p89
    %s92 = sadd.s32 %s91, 1
    %p95 = scmp.eq.s32.totalorder %s15, 1
    %p96 = scmp.ne.s32.totalorder %s91, %s93
    %p97 = scmp.eq.s32.totalorder %s15, 0
    %p98 = por %p96, %p97
    %p99 = scmp.ne.s32.totalorder %s91, %s93
    %p100 = scmp.eq.s32.totalorder %s20, 1
    %p101 = por %p99, %p100
    %p102 = scmp.ne.s32.totalorder %s93, %s94
    %p103 = scmp.eq.s32.totalorder %s20, 0
    %p104 = por %p102, %p103
    %p105 = scmp.ne.s32.totalorder %s93, %s94
    %p106 = scmp.eq.s32.totalorder %s21, 1
    %p107 = por %p105, %p106
    %p109 = scmp.ne.s32.totalorder %s94, %s108
    %p110 = scmp.eq.s32.totalorder %s21, 0
    %p111 = por %p109, %p110
    %s113 = sadd.s32 %s112, 1
    %p116 = scmp.eq.s32.totalorder %s15, 1
    %p117 = scmp.ne.s32.totalorder %s112, %s114
    %p118 = scmp.eq.s32.totalorder %s15, 0
    %p119 = por %p117, %p118
    %p120 = scmp.ne.s32.totalorder %s112, %s114
    %p121 = scmp.eq.s32.totalorder %s20, 1
    %p122 = por %p120, %p121
    %p123 = scmp.ne.s32.totalorder %s114, %s115
    %p124 = scmp.eq.s32.totalorder %s20, 0
    %p125 = por %p123, %p124
    %p126 = scmp.ne.s32.totalorder %s114, %s115
    %p127 = scmp.eq.s32.totalorder %s21, 1
    %p128 = por %p126, %p127
    %p130 = scmp.ne.s32.totalorder %s115, %s129
    %p131 = scmp.eq.s32.totalorder %s21, 0
    %p132 = por %p130, %p131
    %s134 = sadd.s32 %s133, 1
    %p137 = scmp.eq.s32.totalorder %s15, 1
    %p138 = scmp.ne.s32.totalorder %s133, %s135
    %p139 = scmp.eq.s32.totalorder %s15, 0
    %p140 = por %p138, %p139
    %p141 = scmp.ne.s32.totalorder %s133, %s135
    %p142 = scmp.eq.s32.totalorder %s20, 1
    %p143 = por %p141, %p142
    %p144 = scmp.ne.s32.totalorder %s135, %s136
    %p145 = scmp.eq.s32.totalorder %s20, 0
    %p146 = por %p144, %p145
    %p147 = scmp.ne.s32.totalorder %s135, %s136
    %p148 = scmp.eq.s32.totalorder %s21, 1
    %p149 = por %p147, %p148
    %p151 = scmp.ne.s32.totalorder %s136, %s150
    %p152 = scmp.eq.s32.totalorder %s21, 0
    %p153 = por %p151, %p152
    %s155 = sadd.s32 %s154, 1
    %p158 = scmp.eq.s32.totalorder %s15, 1
    %p159 = scmp.ne.s32.totalorder %s154, %s156
    %p160 = scmp.eq.s32.totalorder %s15, 0
    %p161 = por %p159, %p160
    %p162 = scmp.ne.s32.totalorder %s154, %s156
    %p163 = scmp.eq.s32.totalorder %s20, 1
    %p164 = por %p162, %p163
    %p165 = scmp.ne.s32.totalorder %s156, %s157
    %p166 = scmp.eq.s32.totalorder %s20, 0
    %p167 = por %p165, %p166
    %p168 = scmp.ne.s32.totalorder %s156, %s157
    %p169 = scmp.eq.s32.totalorder %s21, 1
    %p170 = por %p168, %p169
    %p172 = scmp.ne.s32.totalorder %s157, %s171
    %p173 = scmp.eq.s32.totalorder %s21, 0
    %p174 = por %p172, %p173
    %s175 = ssub.s32 %s15, %s22
    %p176 = scmp.eq.s32.totalorder %s175, 0
    %s178 = sadd.s32 %s177, 1
    %s179 = scalar_select %p176, %s177, %s178
    %p182 = pneg %p176
    %p183 = scmp.eq.s32.totalorder %s15, 1
    %p184 = por %p182, %p183
    %p185 = scmp.ne.s32.totalorder %s177, %s180
    %p186 = scmp.eq.s32.totalorder %s15, 0
    %p187 = por %p185, %p186
    %p188 = scmp.ne.s32.totalorder %s177, %s180
    %p189 = scmp.eq.s32.totalorder %s20, 1
    %p190 = por %p188, %p189
    %p191 = scmp.ne.s32.totalorder %s180, %s181
    %p192 = scmp.eq.s32.totalorder %s20, 0
    %p193 = por %p191, %p192
    %p194 = scmp.ne.s32.totalorder %s180, %s181
    %p195 = scmp.eq.s32.totalorder %s21, 1
    %p196 = por %p194, %p195
    %p198 = scmp.ne.s32.totalorder %s181, %s197
    %p199 = scmp.eq.s32.totalorder %s21, 0
    %p200 = por %p198, %p199
    %p201 = scmp.le.s32.totalorder 1, %s15
    %p202 = scmp.lt.s32.totalorder %s15, 3
    %p203 = pnand %p201, %p202
    %p204 = pneg %p203
    // Predicated region
    $region9: #{tpu_custom_call.1} parent=5 // pred_check
      _
    $region10: #{tpu_custom_call.1} parent=5 // pred_check_branch
      %206 = sbr.rel (%p203) target = $region12
    $region11: #{tpu_custom_call.1} parent=5 // pred_region
      %s207 = ssub.s32 %s15, 1
      // Predicated region
      $region13: #{tpu_custom_call.1} parent=11 // pred_check
        %p208 = pneg %p62
      $region14: #{tpu_custom_call.1} parent=11 // pred_check_branch
        %210 = sbr.rel (%p208) target = $region16
      $region15: #{tpu_custom_call.1} parent=11 // pred_region
        _
      $region16: #{tpu_custom_call.1} parent=11 // pred_fallthru
        _
      // Predicated region
      $region17: #{tpu_custom_call.1} parent=11 // pred_check
        %p211 = pneg %p83
      $region18: #{tpu_custom_call.1} parent=11 // pred_check_branch
        %213 = sbr.rel (%p211) target = $region20
      $region19: #{tpu_custom_call.1} parent=11 // pred_region
        _
      $region20: #{tpu_custom_call.1} parent=11 // pred_fallthru
        _
      // Predicated region
      $region21: #{tpu_custom_call.1} parent=11 // pred_check
        %p214 = pneg %p104
      $region22: #{tpu_custom_call.1} parent=11 // pred_check_branch
        %216 = sbr.rel (%p214) target = $region24
      $region23: #{tpu_custom_call.1} parent=11 // pred_region
        _
      $region24: #{tpu_custom_call.1} parent=11 // pred_fallthru
        _
      // Predicated region
      $region25: #{tpu_custom_call.1} parent=11 // pred_check
        %p217 = pneg %p125
      $region26: #{tpu_custom_call.1} parent=11 // pred_check_branch
        %219 = sbr.rel (%p217) target = $region28
      $region27: #{tpu_custom_call.1} parent=11 // pred_region
        _
      $region28: #{tpu_custom_call.1} parent=11 // pred_fallthru
        _
      // Predicated region
      $region29: #{tpu_custom_call.1} parent=11 // pred_check
        %p220 = pneg %p146
      $region30: #{tpu_custom_call.1} parent=11 // pred_check_branch
        %222 = sbr.rel (%p220) target = $region32
      $region31: #{tpu_custom_call.1} parent=11 // pred_region
        _
      $region32: #{tpu_custom_call.1} parent=11 // pred_fallthru
        _
      // Predicated region
      $region33: #{tpu_custom_call.1} parent=11 // pred_check
        %p223 = pneg %p167
      $region34: #{tpu_custom_call.1} parent=11 // pred_check_branch
        %225 = sbr.rel (%p223) target = $region36
      $region35: #{tpu_custom_call.1} parent=11 // pred_region
        _
      $region36: #{tpu_custom_call.1} parent=11 // pred_fallthru
        _
    $region12: #{tpu_custom_call.1} parent=5 // pred_fallthru
      _
    %p226 = scmp.lt.s32.totalorder %s15, 2
    // Predicated region
    $region37: #{tpu_custom_call.1} parent=5 // pred_check
      %p227 = pneg %p226
    $region38: #{tpu_custom_call.1} parent=5 // pred_check_branch
      %229 = sbr.rel (%p227) target = $region40
    $region39: #{tpu_custom_call.1} parent=5 // pred_region
      // Predicated region
      $region41: #{tpu_custom_call.1} parent=39 // pred_check
        %p230 = pneg %p35
      $region42: #{tpu_custom_call.1} parent=39 // pred_check_branch
        %232 = sbr.rel (%p230) target = $region44
      $region43: #{tpu_custom_call.1} parent=39 // pred_region
        %s233 = smul.u32 16, %s15
        %p234 = scmp.lt.s32.totalorder %s233, 31
        %s235 = scalar_select %p234, %s233, 31
        %s236 = smul.addr %s235, 8
        %s237 = scalar_lea.vmem %s0, %s236
        %s238 = smul.u32 16, %s15
      $region44: #{tpu_custom_call.1} parent=39 // pred_fallthru
        _
    $region40: #{tpu_custom_call.1} parent=5 // pred_fallthru
      _
    %p239 = scmp.le.s32.totalorder 1, %s15
    %p240 = scmp.lt.s32.totalorder %s15, 3
    %p241 = pnand %p239, %p240
    %p242 = pneg %p241
    // Predicated region
    $region45: #{tpu_custom_call.1} parent=5 // pred_check
      _
    $region46: #{tpu_custom_call.1} parent=5 // pred_check_branch
      %244 = sbr.rel (%p241) target = $region48
    $region47: #{tpu_custom_call.1} parent=5 // pred_region
      %s245 = ssub.s32 %s15, 1
      %s246 = smul.u32 16, %s20
      %p247 = scmp.lt.s32.totalorder %s246, 31
      %s248 = scalar_select %p247, %s246, 31
      %s249 = smul.addr %s248, 8
      %s250 = scalar_lea.vmem %s0, %s249
      %p251 = pneg %p41
      %p252 = pneg %p38
      %p253 = pneg %p62
      %p254 = pneg %p59
      %p255 = pneg %p83
      %p256 = pneg %p80
      %p257 = pneg %p104
      %p258 = pneg %p101
      %p259 = pneg %p125
      %p260 = pneg %p122
      %p261 = pneg %p146
      %p262 = pneg %p143
      %p263 = pneg %p167
      %p264 = pneg %p164
      %p265 = pneg %p193
      %p266 = pneg %p190
      %s267 = smul.u32 16, %s20
      %p268 = scmp.lt.s32.totalorder %s267, 31
      %s269 = scalar_select %p268, %s267, 31
      %s270 = smul.addr %s269, 8
      %s271 = scalar_lea.vmem %s7, %s270
      %s272 = smul.u32 16, %s20
      %p273 = scmp.lt.s32.totalorder %s272, 31
      %s274 = scalar_select %p273, %s272, 31
      %s275 = smul.addr %s274, 8
      %s276 = scalar_lea.vmem %s0, %s275
      %s277 = smul.u32 16, %s20
      %s278 = smul.u32 16, %s20
      %p279 = scmp.lt.s32.totalorder %s278, 31
      %s280 = scalar_select %p279, %s278, 31
      %s281 = smul.addr %s280, 8
      %s282 = scalar_lea.vmem %s7, %s281
      %s283 = smul.u32 16, %s20
      %v284 = vld [vmem:[%s276] sm:$0xff]
      %v285 = vld [vmem:[%s276 + $0x8] sm:$0xff]
      %v286 = vld [vmem:[%s276 + $0x10] sm:$0xff]
      %v287 = vld [vmem:[%s276 + $0x18] sm:$0xff]
      %v288 = vld [vmem:[%s276 + $0x20] sm:$0xff]
      %v289 = vld [vmem:[%s276 + $0x28] sm:$0xff]
      %v290 = vld [vmem:[%s276 + $0x30] sm:$0xff]
      %v291 = vld [vmem:[%s276 + $0x38] sm:$0xff]
      %v292 = vld [vmem:[%s276 + $0x40] sm:$0xff]
      %v293 = vld [vmem:[%s276 + $0x48] sm:$0xff]
      %v294 = vld [vmem:[%s276 + $0x50] sm:$0xff]
      %v295 = vld [vmem:[%s276 + $0x58] sm:$0xff]
      %v296 = vld [vmem:[%s276 + $0x60] sm:$0xff]
      %v297 = vld [vmem:[%s276 + $0x68] sm:$0xff]
      %v298 = vld [vmem:[%s276 + $0x70] sm:$0xff]
      %v299 = vld [vmem:[%s276 + $0x78] sm:$0xff]
      %v300 = vld [vmem:[%s1] sm:$0xf]
      %v301 = vld [vmem:[%s2] sm:$0x1]
      %v303 = vlaneseq
      %v304 = vshrl.u32 %v303, 7
      %v305 = vsub.s32 0, %v304
      %v306 = vrot.slane %v301, %v305
      %vm308 = vcmask 31744
      %v310 = vsel %vm308, %v284, 0
      %v313 = vsel %vm308, %v285, 0
      %v316 = vsel %vm308, %v286, 0
      %v319 = vsel %vm308, %v287, 0
      %v322 = vsel %vm308, %v288, 0
      %v325 = vsel %vm308, %v289, 0
      %v328 = vsel %vm308, %v290, 0
      %v331 = vsel %vm308, %v291, 0
      %v334 = vsel %vm308, %v292, 0
      %v337 = vsel %vm308, %v293, 0
      %v340 = vsel %vm308, %v294, 0
      %v343 = vsel %vm308, %v295, 0
      %v346 = vsel %vm308, %v296, 0
      %v349 = vsel %vm308, %v297, 0
      %v352 = vsel %vm308, %v298, 0
      %v355 = vsel %vm308, %v299, 0
      %vm357 = vcmask 1043456
      %v359 = vsel %vm357, %v300, 0
      %361 = vmatprep.subr.mxu0 0.0
      %362 = vmatpush1.msra.mxu0 %v359
      %363 = vmatprep.subr.mxu0 0.0
      %364 = vmatpush1.msra.mxu0 0.0
      %365 = vmatprep.subr.mxu0 0.0
      %366 = vmatpush1.msra.mxu0 0.0
      %367 = vmatprep.subr.mxu0 0.0
      %368 = vmatpush1.msra.mxu0 0.0
      %369 = vmatprep.subr.mxu0 0.0
      %370 = vmatpush1.msra.mxu0 0.0
      %371 = vmatprep.subr.mxu0 0.0
      %372 = vmatpush1.msra.mxu0 0.0
      %373 = vmatprep.subr.mxu0 0.0
      %374 = vmatpush1.msra.mxu0 0.0
      %375 = vmatprep.subr.mxu0 0.0
      %376 = vmatpush1.msra.mxu0 0.0
      %377 = vmatprep.subr.mxu0 0.0
      %378 = vmatpush1.msra.mxu0 0.0
      %379 = vmatprep.subr.mxu0 0.0
      %380 = vmatpush1.msra.mxu0 0.0
      %381 = vmatprep.subr.mxu0 0.0
      %382 = vmatpush1.msra.mxu0 0.0
      %383 = vmatprep.subr.mxu0 0.0
      %384 = vmatpush1.msra.mxu0 0.0
      %385 = vmatprep.subr.mxu0 0.0
      %386 = vmatpush1.msra.mxu0 0.0
      %387 = vmatprep.subr.mxu0 0.0
      %388 = vmatpush1.msra.mxu0 0.0
      %389 = vmatprep.subr.mxu0 0.0
      %390 = vmatpush1.msra.mxu0 0.0
      %391 = vmatprep.subr.mxu0 0.0
      %392 = vmatpush1.msra.mxu0 0.0
      %393 = vmatprep.subr.mxu0 0.0
      %394 = vmatpush1.msra.mxu0 0.0
      %395 = vmatprep.subr.mxu0 0.0
      %396 = vmatpush1.msra.mxu0 0.0
      %397 = vmatprep.subr.mxu0 0.0
      %398 = vmatpush1.msra.mxu0 0.0
      %399 = vmatprep.subr.mxu0 0.0
      %400 = vmatpush1.msra.mxu0 0.0
      %401 = vmatprep.subr.mxu0 0.0
      %402 = vmatpush1.msra.mxu0 0.0
      %403 = vmatprep.subr.mxu0 0.0
      %404 = vmatpush1.msra.mxu0 0.0
      %405 = vmatprep.subr.mxu0 0.0
      %406 = vmatpush1.msra.mxu0 0.0
      %407 = vmatprep.subr.mxu0 0.0
      %408 = vmatpush1.msra.mxu0 0.0
      %409 = vmatprep.subr.mxu0 0.0
      %410 = vmatpush1.msra.mxu0 0.0
      %411 = vmatprep.subr.mxu0 0.0
      %412 = vmatpush1.msra.mxu0 0.0
      %413 = vmatprep.subr.mxu0 0.0
      %414 = vmatpush1.msra.mxu0 0.0
      %415 = vmatprep.subr.mxu0 0.0
      %416 = vmatpush1.msra.mxu0 0.0
      %417 = vmatprep.subr.mxu0 0.0
      %418 = vmatpush1.msra.mxu0 0.0
      %419 = vmatprep.subr.mxu0 0.0
      %420 = vmatpush1.msra.mxu0 0.0
      %421 = vmatprep.subr.mxu0 0.0
      %422 = vmatpush1.msra.mxu0 0.0
      %423 = vmatprep.subr.mxu0 0.0
      %424 = vmatpush1.msra.mxu0 0.0
      %425 = vmatprep.mubr.f32.mxu0 0.0
      %426 = vmatmul.mubr.f32.gmra.mrb[0].mxu0 %v310
      %v427 = vpop.f32.mrb[0].mxu0
      %v428 = vadd.f32 %v306, %v427
      %v429 = vpop.f32.mrb[0].mxu0
      %430 = vmatprep.mubr.f32.mxu0 0.0
      %431 = vmatmul.mubr.f32.gmra.mrb[0].mxu0 %v313
      %v432 = vpop.f32.mrb[0].mxu0
      %v433 = vadd.f32 %v306, %v432
      %v434 = vpop.f32.mrb[0].mxu0
      %435 = vmatprep.mubr.f32.mxu0 0.0
      %436 = vmatmul.mubr.f32.gmra.mrb[0].mxu0 %v316
      %v437 = vpop.f32.mrb[0].mxu0
      %v438 = vadd.f32 %v306, %v437
      %v439 = vpop.f32.mrb[0].mxu0
      %440 = vmatprep.mubr.f32.mxu0 0.0
      %441 = vmatmul.mubr.f32.gmra.mrb[0].mxu0 %v319
      %v442 = vpop.f32.mrb[0].mxu0
      %v443 = vadd.f32 %v306, %v442
      %v444 = vpop.f32.mrb[0].mxu0
      %445 = vmatprep.mubr.f32.mxu0 0.0
      %446 = vmatmul.mubr.f32.gmra.mrb[0].mxu0 %v322
      %v447 = vpop.f32.mrb[0].mxu0
      %v448 = vadd.f32 %v306, %v447
      %v449 = vpop.f32.mrb[0].mxu0
      %450 = vmatprep.mubr.f32.mxu0 0.0
      %451 = vmatmul.mubr.f32.gmra.mrb[0].mxu0 %v325
      %v452 = vpop.f32.mrb[0].mxu0
      %v453 = vadd.f32 %v306, %v452
      %v454 = vpop.f32.mrb[0].mxu0
      %455 = vmatprep.mubr.f32.mxu0 0.0
      %456 = vmatmul.mubr.f32.gmra.mrb[0].mxu0 %v328
      %v457 = vpop.f32.mrb[0].mxu0
      %v458 = vadd.f32 %v306, %v457
      %v459 = vpop.f32.mrb[0].mxu0
      %460 = vmatprep.mubr.f32.mxu0 0.0
      %461 = vmatmul.mubr.f32.gmra.mrb[0].mxu0 %v331
      %v462 = vpop.f32.mrb[0].mxu0
      %v463 = vadd.f32 %v306, %v462
      %v464 = vpop.f32.mrb[0].mxu0
      %465 = vmatprep.mubr.f32.mxu0 0.0
      %466 = vmatmul.mubr.f32.gmra.mrb[0].mxu0 %v334
      %v467 = vpop.f32.mrb[0].mxu0
      %v468 = vadd.f32 %v306, %v467
      %v469 = vpop.f32.mrb[0].mxu0
      %470 = vmatprep.mubr.f32.mxu0 0.0
      %471 = vmatmul.mubr.f32.gmra.mrb[0].mxu0 %v337
      %v472 = vpop.f32.mrb[0].mxu0
      %v473 = vadd.f32 %v306, %v472
      %v474 = vpop.f32.mrb[0].mxu0
      %475 = vmatprep.mubr.f32.mxu0 0.0
      %476 = vmatmul.mubr.f32.gmra.mrb[0].mxu0 %v340
      %v477 = vpop.f32.mrb[0].mxu0
      %v478 = vadd.f32 %v306, %v477
      %v479 = vpop.f32.mrb[0].mxu0
      %480 = vmatprep.mubr.f32.mxu0 0.0
      %481 = vmatmul.mubr.f32.gmra.mrb[0].mxu0 %v343
      %v482 = vpop.f32.mrb[0].mxu0
      %v483 = vadd.f32 %v306, %v482
      %v484 = vpop.f32.mrb[0].mxu0
      %485 = vmatprep.mubr.f32.mxu0 0.0
      %486 = vmatmul.mubr.f32.gmra.mrb[0].mxu0 %v346
      %v487 = vpop.f32.mrb[0].mxu0
      %v488 = vadd.f32 %v306, %v487
      %v489 = vpop.f32.mrb[0].mxu0
      %490 = vmatprep.mubr.f32.mxu0 0.0
      %491 = vmatmul.mubr.f32.gmra.mrb[0].mxu0 %v349
      %v492 = vpop.f32.mrb[0].mxu0
      %v493 = vadd.f32 %v306, %v492
      %v494 = vpop.f32.mrb[0].mxu0
      %495 = vmatprep.mubr.f32.mxu0 0.0
      %496 = vmatmul.mubr.f32.gmra.mrb[0].mxu0 %v352
      %v497 = vpop.f32.mrb[0].mxu0
      %v498 = vadd.f32 %v306, %v497
      %v499 = vpop.f32.mrb[0].mxu0
      %500 = vmatprep.mubr.f32.mxu0 0.0
      %501 = vmatmul.mubr.f32.gmra.mrb[0].mxu0 %v355
      %v502 = vpop.f32.mrb[0].mxu0
      %v503 = vadd.f32 %v306, %v502
      %v504 = vpop.f32.mrb[0].mxu0
      %505 = vdwg.mxu0
      %v506 = vmax.f32 %v428, 0.0
      %v507 = vmax.f32 %v433, 0.0
      %v508 = vmax.f32 %v438, 0.0
      %v509 = vmax.f32 %v443, 0.0
      %v510 = vmax.f32 %v448, 0.0
      %v511 = vmax.f32 %v453, 0.0
      %v512 = vmax.f32 %v458, 0.0
      %v513 = vmax.f32 %v463, 0.0
      %v514 = vmax.f32 %v468, 0.0
      %v515 = vmax.f32 %v473, 0.0
      %v516 = vmax.f32 %v478, 0.0
      %v517 = vmax.f32 %v483, 0.0
      %v518 = vmax.f32 %v488, 0.0
      %v519 = vmax.f32 %v493, 0.0
      %v520 = vmax.f32 %v498, 0.0
      %v521 = vmax.f32 %v503, 0.0
      %v522 = vld [vmem:[%s3] sm:$0xff]
      %v523 = vld [vmem:[%s3 + $0x8] sm:$0xff]
      %v524 = vld [vmem:[%s3 + $0x10] sm:$0xff]
      %v525 = vld [vmem:[%s3 + $0x18] sm:$0xff]
      %v526 = vld [vmem:[%s3 + $0x20] sm:$0xff]
      %v527 = vld [vmem:[%s3 + $0x28] sm:$0xff]
      %v528 = vld [vmem:[%s3 + $0x30] sm:$0xff]
      %v529 = vld [vmem:[%s3 + $0x38] sm:$0xff]
      %v530 = vld [vmem:[%s3 + $0x40] sm:$0xff]
      %v531 = vld [vmem:[%s3 + $0x48] sm:$0xff]
      %v532 = vld [vmem:[%s3 + $0x50] sm:$0xff]
      %v533 = vld [vmem:[%s3 + $0x58] sm:$0xff]
      %v534 = vld [vmem:[%s3 + $0x60] sm:$0xff]
      %v535 = vld [vmem:[%s3 + $0x68] sm:$0xff]
      %v536 = vld [vmem:[%s3 + $0x70] sm:$0xff]
      %v537 = vld [vmem:[%s3 + $0x78] sm:$0xff]
      %v538 = vld [vmem:[%s4] sm:$0x1]
      %v540 = vlaneseq
      %v541 = vshrl.u32 %v540, 7
      %v542 = vsub.s32 0, %v541
      %v543 = vrot.slane %v538, %v542
      %545 = vmatprep.subr.mxu0 0.0
      %546 = vmatpush1.msra.mxu0 %v522
      %547 = vmatprep.subr.mxu0 0.0
      %548 = vmatpush1.msra.mxu0 %v523
      %549 = vmatprep.subr.mxu0 0.0
      %550 = vmatpush1.msra.mxu0 %v524
      %551 = vmatprep.subr.mxu0 0.0
      %552 = vmatpush1.msra.mxu0 %v525
      %553 = vmatprep.subr.mxu0 0.0
      %554 = vmatpush1.msra.mxu0 %v526
      %555 = vmatprep.subr.mxu0 0.0
      %556 = vmatpush1.msra.mxu0 %v527
      %557 = vmatprep.subr.mxu0 0.0
      %558 = vmatpush1.msra.mxu0 %v528
      %559 = vmatprep.subr.mxu0 0.0
      %560 = vmatpush1.msra.mxu0 %v529
      %561 = vmatprep.subr.mxu0 0.0
      %562 = vmatpush1.msra.mxu0 %v530
      %563 = vmatprep.subr.mxu0 0.0
      %564 = vmatpush1.msra.mxu0 %v531
      %565 = vmatprep.subr.mxu0 0.0
      %566 = vmatpush1.msra.mxu0 %v532
      %567 = vmatprep.subr.mxu0 0.0
      %568 = vmatpush1.msra.mxu0 %v533
      %569 = vmatprep.subr.mxu0 0.0
      %570 = vmatpush1.msra.mxu0 %v534
      %571 = vmatprep.subr.mxu0 0.0
      %572 = vmatpush1.msra.mxu0 %v535
      %573 = vmatprep.subr.mxu0 0.0
      %574 = vmatpush1.msra.mxu0 %v536
      %575 = vmatprep.subr.mxu0 0.0
      %576 = vmatpush1.msra.mxu0 %v537
      %577 = vmatprep.subr.mxu0 0.0
      %578 = vmatpush1.msra.mxu0 0.0
      %579 = vmatprep.subr.mxu0 0.0
      %580 = vmatpush1.msra.mxu0 0.0
      %581 = vmatprep.subr.mxu0 0.0
      %582 = vmatpush1.msra.mxu0 0.0
      %583 = vmatprep.subr.mxu0 0.0
      %584 = vmatpush1.msra.mxu0 0.0
      %585 = vmatprep.subr.mxu0 0.0
      %586 = vmatpush1.msra.mxu0 0.0
      %587 = vmatprep.subr.mxu0 0.0
      %588 = vmatpush1.msra.mxu0 0.0
      %589 = vmatprep.subr.mxu0 0.0
      %590 = vmatpush1.msra.mxu0 0.0
      %591 = vmatprep.subr.mxu0 0.0
      %592 = vmatpush1.msra.mxu0 0.0
      %593 = vmatprep.subr.mxu0 0.0
      %594 = vmatpush1.msra.mxu0 0.0
      %595 = vmatprep.subr.mxu0 0.0
      %596 = vmatpush1.msra.mxu0 0.0
      %597 = vmatprep.subr.mxu0 0.0
      %598 = vmatpush1.msra.mxu0 0.0
      %599 = vmatprep.subr.mxu0 0.0
      %600 = vmatpush1.msra.mxu0 0.0
      %601 = vmatprep.subr.mxu0 0.0
      %602 = vmatpush1.msra.mxu0 0.0
      %603 = vmatprep.subr.mxu0 0.0
      %604 = vmatpush1.msra.mxu0 0.0
      %605 = vmatprep.subr.mxu0 0.0
      %606 = vmatpush1.msra.mxu0 0.0
      %607 = vmatprep.subr.mxu0 0.0
      %608 = vmatpush1.msra.mxu0 0.0
      %609 = vmatprep.mubr.f32.mxu0 0.0
      %610 = vmatmul.mubr.f32.gmra.mrb[0].mxu0 %v506
      %v611 = vpop.f32.mrb[0].mxu0
      %v612 = vadd.f32 %v543, %v611
      %v613 = vpop.f32.mrb[0].mxu0
      %614 = vmatprep.mubr.f32.mxu0 0.0
      %615 = vmatmul.mubr.f32.gmra.mrb[0].mxu0 %v507
      %v616 = vpop.f32.mrb[0].mxu0
      %v617 = vadd.f32 %v543, %v616
      %v618 = vpop.f32.mrb[0].mxu0
      %619 = vmatprep.mubr.f32.mxu0 0.0
      %620 = vmatmul.mubr.f32.gmra.mrb[0].mxu0 %v508
      %v621 = vpop.f32.mrb[0].mxu0
      %v622 = vadd.f32 %v543, %v621
      %v623 = vpop.f32.mrb[0].mxu0
      %624 = vmatprep.mubr.f32.mxu0 0.0
      %625 = vmatmul.mubr.f32.gmra.mrb[0].mxu0 %v509
      %v626 = vpop.f32.mrb[0].mxu0
      %v627 = vadd.f32 %v543, %v626
      %v628 = vpop.f32.mrb[0].mxu0
      %629 = vmatprep.mubr.f32.mxu0 0.0
      %630 = vmatmul.mubr.f32.gmra.mrb[0].mxu0 %v510
      %v631 = vpop.f32.mrb[0].mxu0
      %v632 = vadd.f32 %v543, %v631
      %v633 = vpop.f32.mrb[0].mxu0
      %634 = vmatprep.mubr.f32.mxu0 0.0
      %635 = vmatmul.mubr.f32.gmra.mrb[0].mxu0 %v511
      %v636 = vpop.f32.mrb[0].mxu0
      %v637 = vadd.f32 %v543, %v636
      %v638 = vpop.f32.mrb[0].mxu0
      %639 = vmatprep.mubr.f32.mxu0 0.0
      %640 = vmatmul.mubr.f32.gmra.mrb[0].mxu0 %v512
      %v641 = vpop.f32.mrb[0].mxu0
      %v642 = vadd.f32 %v543, %v641
      %v643 = vpop.f32.mrb[0].mxu0
      %644 = vmatprep.mubr.f32.mxu0 0.0
      %645 = vmatmul.mubr.f32.gmra.mrb[0].mxu0 %v513
      %v646 = vpop.f32.mrb[0].mxu0
      %v647 = vadd.f32 %v543, %v646
      %v648 = vpop.f32.mrb[0].mxu0
      %649 = vmatprep.mubr.f32.mxu0 0.0
      %650 = vmatmul.mubr.f32.gmra.mrb[0].mxu0 %v514
      %v651 = vpop.f32.mrb[0].mxu0
      %v652 = vadd.f32 %v543, %v651
      %v653 = vpop.f32.mrb[0].mxu0
      %654 = vmatprep.mubr.f32.mxu0 0.0
      %655 = vmatmul.mubr.f32.gmra.mrb[0].mxu0 %v515
      %v656 = vpop.f32.mrb[0].mxu0
      %v657 = vadd.f32 %v543, %v656
      %v658 = vpop.f32.mrb[0].mxu0
      %659 = vmatprep.mubr.f32.mxu0 0.0
      %660 = vmatmul.mubr.f32.gmra.mrb[0].mxu0 %v516
      %v661 = vpop.f32.mrb[0].mxu0
      %v662 = vadd.f32 %v543, %v661
      %v663 = vpop.f32.mrb[0].mxu0
      %664 = vmatprep.mubr.f32.mxu0 0.0
      %665 = vmatmul.mubr.f32.gmra.mrb[0].mxu0 %v517
      %v666 = vpop.f32.mrb[0].mxu0
      %v667 = vadd.f32 %v543, %v666
      %v668 = vpop.f32.mrb[0].mxu0
      %669 = vmatprep.mubr.f32.mxu0 0.0
      %670 = vmatmul.mubr.f32.gmra.mrb[0].mxu0 %v518
      %v671 = vpop.f32.mrb[0].mxu0
      %v672 = vadd.f32 %v543, %v671
      %v673 = vpop.f32.mrb[0].mxu0
      %674 = vmatprep.mubr.f32.mxu0 0.0
      %675 = vmatmul.mubr.f32.gmra.mrb[0].mxu0 %v519
      %v676 = vpop.f32.mrb[0].mxu0
      %v677 = vadd.f32 %v543, %v676
      %v678 = vpop.f32.mrb[0].mxu0
      %679 = vmatprep.mubr.f32.mxu0 0.0
      %680 = vmatmul.mubr.f32.gmra.mrb[0].mxu0 %v520
      %v681 = vpop.f32.mrb[0].mxu0
      %v682 = vadd.f32 %v543, %v681
      %v683 = vpop.f32.mrb[0].mxu0
      %684 = vmatprep.mubr.f32.mxu0 0.0
      %685 = vmatmul.mubr.f32.gmra.mrb[0].mxu0 %v521
      %v686 = vpop.f32.mrb[0].mxu0
      %v687 = vadd.f32 %v543, %v686
      %v688 = vpop.f32.mrb[0].mxu0
      %689 = vdwg.mxu0
      %v690 = vmax.f32 %v612, 0.0
      %v691 = vmax.f32 %v617, 0.0
      %v692 = vmax.f32 %v622, 0.0
      %v693 = vmax.f32 %v627, 0.0
      %v694 = vmax.f32 %v632, 0.0
      %v695 = vmax.f32 %v637, 0.0
      %v696 = vmax.f32 %v642, 0.0
      %v697 = vmax.f32 %v647, 0.0
      %v698 = vmax.f32 %v652, 0.0
      %v699 = vmax.f32 %v657, 0.0
      %v700 = vmax.f32 %v662, 0.0
      %v701 = vmax.f32 %v667, 0.0
      %v702 = vmax.f32 %v672, 0.0
      %v703 = vmax.f32 %v677, 0.0
      %v704 = vmax.f32 %v682, 0.0
      %v705 = vmax.f32 %v687, 0.0
      %v706 = vld [vmem:[%s5] sm:$0xff]
      %v707 = vld [vmem:[%s5 + $0x8] sm:$0xff]
      %v708 = vld [vmem:[%s5 + $0x10] sm:$0xff]
      %v709 = vld [vmem:[%s5 + $0x18] sm:$0xff]
      %v710 = vld [vmem:[%s5 + $0x20] sm:$0xff]
      %v711 = vld [vmem:[%s5 + $0x28] sm:$0xff]
      %v712 = vld [vmem:[%s5 + $0x30] sm:$0xff]
      %v713 = vld [vmem:[%s5 + $0x38] sm:$0xff]
      %v714 = vld [vmem:[%s5 + $0x40] sm:$0xff]
      %v715 = vld [vmem:[%s5 + $0x48] sm:$0xff]
      %v716 = vld [vmem:[%s5 + $0x50] sm:$0xff]
      %v717 = vld [vmem:[%s5 + $0x58] sm:$0xff]
      %v718 = vld [vmem:[%s5 + $0x60] sm:$0xff]
      %v719 = vld [vmem:[%s5 + $0x68] sm:$0xff]
      %v720 = vld [vmem:[%s5 + $0x70] sm:$0xff]
      %v721 = vld [vmem:[%s5 + $0x78] sm:$0xff]
      %v722 = vld [vmem:[#allocation2] sm:$0x1]
      %v724 = vlaneseq
      %v725 = vshrl.u32 %v724, 7
      %v726 = vsub.s32 0, %v725
      %v727 = vrot.slane %v722, %v726
      %729 = vmatprep.subr.mxu0 0.0
      %730 = vmatpush1.msra.mxu0 %v706
      %731 = vmatprep.subr.mxu0 0.0
      %732 = vmatpush1.msra.mxu0 %v707
      %733 = vmatprep.subr.mxu0 0.0
      %734 = vmatpush1.msra.mxu0 %v708
      %735 = vmatprep.subr.mxu0 0.0
      %736 = vmatpush1.msra.mxu0 %v709
      %737 = vmatprep.subr.mxu0 0.0
      %738 = vmatpush1.msra.mxu0 %v710
      %739 = vmatprep.subr.mxu0 0.0
      %740 = vmatpush1.msra.mxu0 %v711
      %741 = vmatprep.subr.mxu0 0.0
      %742 = vmatpush1.msra.mxu0 %v712
      %743 = vmatprep.subr.mxu0 0.0
      %744 = vmatpush1.msra.mxu0 %v713
      %745 = vmatprep.subr.mxu0 0.0
      %746 = vmatpush1.msra.mxu0 %v714
      %747 = vmatprep.subr.mxu0 0.0
      %748 = vmatpush1.msra.mxu0 %v715
      %749 = vmatprep.subr.mxu0 0.0
      %750 = vmatpush1.msra.mxu0 %v716
      %751 = vmatprep.subr.mxu0 0.0
      %752 = vmatpush1.msra.mxu0 %v717
      %753 = vmatprep.subr.mxu0 0.0
      %754 = vmatpush1.msra.mxu0 %v718
      %755 = vmatprep.subr.mxu0 0.0
      %756 = vmatpush1.msra.mxu0 %v719
      %757 = vmatprep.subr.mxu0 0.0
      %758 = vmatpush1.msra.mxu0 %v720
      %759 = vmatprep.subr.mxu0 0.0
      %760 = vmatpush1.msra.mxu0 %v721
      %761 = vmatprep.subr.mxu0 0.0
      %762 = vmatpush1.msra.mxu0 0.0
      %763 = vmatprep.subr.mxu0 0.0
      %764 = vmatpush1.msra.mxu0 0.0
      %765 = vmatprep.subr.mxu0 0.0
      %766 = vmatpush1.msra.mxu0 0.0
      %767 = vmatprep.subr.mxu0 0.0
      %768 = vmatpush1.msra.mxu0 0.0
      %769 = vmatprep.subr.mxu0 0.0
      %770 = vmatpush1.msra.mxu0 0.0
      %771 = vmatprep.subr.mxu0 0.0
      %772 = vmatpush1.msra.mxu0 0.0
      %773 = vmatprep.subr.mxu0 0.0
      %774 = vmatpush1.msra.mxu0 0.0
      %775 = vmatprep.subr.mxu0 0.0
      %776 = vmatpush1.msra.mxu0 0.0
      %777 = vmatprep.subr.mxu0 0.0
      %778 = vmatpush1.msra.mxu0 0.0
      %779 = vmatprep.subr.mxu0 0.0
      %780 = vmatpush1.msra.mxu0 0.0
      %781 = vmatprep.subr.mxu0 0.0
      %782 = vmatpush1.msra.mxu0 0.0
      %783 = vmatprep.subr.mxu0 0.0
      %784 = vmatpush1.msra.mxu0 0.0
      %785 = vmatprep.subr.mxu0 0.0
      %786 = vmatpush1.msra.mxu0 0.0
      %787 = vmatprep.subr.mxu0 0.0
      %788 = vmatpush1.msra.mxu0 0.0
      %789 = vmatprep.subr.mxu0 0.0
      %790 = vmatpush1.msra.mxu0 0.0
      %791 = vmatprep.subr.mxu0 0.0
      %792 = vmatpush1.msra.mxu0 0.0
      %793 = vmatprep.mubr.f32.mxu0 0.0
      %794 = vmatmul.mubr.f32.gmra.mrb[0].mxu0 %v690
      %v795 = vpop.f32.mrb[0].mxu0
      %v796 = vadd.f32 %v727, %v795
      %v797 = vpop.f32.mrb[0].mxu0
      %798 = vmatprep.mubr.f32.mxu0 0.0
      %799 = vmatmul.mubr.f32.gmra.mrb[0].mxu0 %v691
      %v800 = vpop.f32.mrb[0].mxu0
      %v801 = vadd.f32 %v727, %v800
      %v802 = vpop.f32.mrb[0].mxu0
      %803 = vmatprep.mubr.f32.mxu0 0.0
      %804 = vmatmul.mubr.f32.gmra.mrb[0].mxu0 %v692
      %v805 = vpop.f32.mrb[0].mxu0
      %v806 = vadd.f32 %v727, %v805
      %v807 = vpop.f32.mrb[0].mxu0
      %808 = vmatprep.mubr.f32.mxu0 0.0
      %809 = vmatmul.mubr.f32.gmra.mrb[0].mxu0 %v693
      %v810 = vpop.f32.mrb[0].mxu0
      %v811 = vadd.f32 %v727, %v810
      %v812 = vpop.f32.mrb[0].mxu0
      %813 = vmatprep.mubr.f32.mxu0 0.0
      %814 = vmatmul.mubr.f32.gmra.mrb[0].mxu0 %v694
      %v815 = vpop.f32.mrb[0].mxu0
      %v816 = vadd.f32 %v727, %v815
      %v817 = vpop.f32.mrb[0].mxu0
      %818 = vmatprep.mubr.f32.mxu0 0.0
      %819 = vmatmul.mubr.f32.gmra.mrb[0].mxu0 %v695
      %v820 = vpop.f32.mrb[0].mxu0
      %v821 = vadd.f32 %v727, %v820
      %v822 = vpop.f32.mrb[0].mxu0
      %823 = vmatprep.mubr.f32.mxu0 0.0
      %824 = vmatmul.mubr.f32.gmra.mrb[0].mxu0 %v696
      %v825 = vpop.f32.mrb[0].mxu0
      %v826 = vadd.f32 %v727, %v825
      %v827 = vpop.f32.mrb[0].mxu0
      %828 = vmatprep.mubr.f32.mxu0 0.0
      %829 = vmatmul.mubr.f32.gmra.mrb[0].mxu0 %v697
      %v830 = vpop.f32.mrb[0].mxu0
      %v831 = vadd.f32 %v727, %v830
      %v832 = vpop.f32.mrb[0].mxu0
      %833 = vmatprep.mubr.f32.mxu0 0.0
      %834 = vmatmul.mubr.f32.gmra.mrb[0].mxu0 %v698
      %v835 = vpop.f32.mrb[0].mxu0
      %v836 = vadd.f32 %v727, %v835
      %v837 = vpop.f32.mrb[0].mxu0
      %838 = vmatprep.mubr.f32.mxu0 0.0
      %839 = vmatmul.mubr.f32.gmra.mrb[0].mxu0 %v699
      %v840 = vpop.f32.mrb[0].mxu0
      %v841 = vadd.f32 %v727, %v840
      %v842 = vpop.f32.mrb[0].mxu0
      %843 = vmatprep.mubr.f32.mxu0 0.0
      %844 = vmatmul.mubr.f32.gmra.mrb[0].mxu0 %v700
      %v845 = vpop.f32.mrb[0].mxu0
      %v846 = vadd.f32 %v727, %v845
      %v847 = vpop.f32.mrb[0].mxu0
      %848 = vmatprep.mubr.f32.mxu0 0.0
      %849 = vmatmul.mubr.f32.gmra.mrb[0].mxu0 %v701
      %v850 = vpop.f32.mrb[0].mxu0
      %v851 = vadd.f32 %v727, %v850
      %v852 = vpop.f32.mrb[0].mxu0
      %853 = vmatprep.mubr.f32.mxu0 0.0
      %854 = vmatmul.mubr.f32.gmra.mrb[0].mxu0 %v702
      %v855 = vpop.f32.mrb[0].mxu0
      %v856 = vadd.f32 %v727, %v855
      %v857 = vpop.f32.mrb[0].mxu0
      %858 = vmatprep.mubr.f32.mxu0 0.0
      %859 = vmatmul.mubr.f32.gmra.mrb[0].mxu0 %v703
      %v860 = vpop.f32.mrb[0].mxu0
      %v861 = vadd.f32 %v727, %v860
      %v862 = vpop.f32.mrb[0].mxu0
      %863 = vmatprep.mubr.f32.mxu0 0.0
      %864 = vmatmul.mubr.f32.gmra.mrb[0].mxu0 %v704
      %v865 = vpop.f32.mrb[0].mxu0
      %v866 = vadd.f32 %v727, %v865
      %v867 = vpop.f32.mrb[0].mxu0
      %868 = vmatprep.mubr.f32.mxu0 0.0
      %869 = vmatmul.mubr.f32.gmra.mrb[0].mxu0 %v705
      %v870 = vpop.f32.mrb[0].mxu0
      %v871 = vadd.f32 %v727, %v870
      %v872 = vpop.f32.mrb[0].mxu0
      %873 = vdwg.mxu0
      %v874 = vsub.f32 0.0, %v796
      %v875 = vsub.f32 0.0, %v801
      %v876 = vsub.f32 0.0, %v806
      %v877 = vsub.f32 0.0, %v811
      %v878 = vsub.f32 0.0, %v816
      %v879 = vsub.f32 0.0, %v821
      %v880 = vsub.f32 0.0, %v826
      %v881 = vsub.f32 0.0, %v831
      %v882 = vsub.f32 0.0, %v836
      %v883 = vsub.f32 0.0, %v841
      %v884 = vsub.f32 0.0, %v846
      %v885 = vsub.f32 0.0, %v851
      %v886 = vsub.f32 0.0, %v856
      %v887 = vsub.f32 0.0, %v861
      %v888 = vsub.f32 0.0, %v866
      %v889 = vsub.f32 0.0, %v871
      %v890 = vmul.f32 %v874, 1.442695
      %v891 = vpow.pop %v890
      %v892 = vmul.f32 %v875, 1.442695
      %v893 = vpow.pop %v892
      %v894 = vmul.f32 %v876, 1.442695
      %v895 = vpow.pop %v894
      %v896 = vmul.f32 %v877, 1.442695
      %v897 = vpow.pop %v896
      %v898 = vmul.f32 %v878, 1.442695
      %v899 = vpow.pop %v898
      %v900 = vmul.f32 %v879, 1.442695
      %v901 = vpow.pop %v900
      %v902 = vmul.f32 %v880, 1.442695
      %v903 = vpow.pop %v902
      %v904 = vmul.f32 %v881, 1.442695
      %v905 = vpow.pop %v904
      %v906 = vmul.f32 %v882, 1.442695
      %v907 = vpow.pop %v906
      %v908 = vmul.f32 %v883, 1.442695
      %v909 = vpow.pop %v908
      %v910 = vmul.f32 %v884, 1.442695
      %v911 = vpow.pop %v910
      %v912 = vmul.f32 %v885, 1.442695
      %v913 = vpow.pop %v912
      %v914 = vmul.f32 %v886, 1.442695
      %v915 = vpow.pop %v914
      %v916 = vmul.f32 %v887, 1.442695
      %v917 = vpow.pop %v916
      %v918 = vmul.f32 %v888, 1.442695
      %v919 = vpow.pop %v918
      %v920 = vmul.f32 %v889, 1.442695
      %v921 = vpow.pop %v920
      %v922 = vadd.f32 %v891, 1.0
      %v923 = vadd.f32 %v893, 1.0
      %v924 = vadd.f32 %v895, 1.0
      %v925 = vadd.f32 %v897, 1.0
      %v926 = vadd.f32 %v899, 1.0
      %v927 = vadd.f32 %v901, 1.0
      %v928 = vadd.f32 %v903, 1.0
      %v929 = vadd.f32 %v905, 1.0
      %v930 = vadd.f32 %v907, 1.0
      %v931 = vadd.f32 %v909, 1.0
      %v932 = vadd.f32 %v911, 1.0
      %v933 = vadd.f32 %v913, 1.0
      %v934 = vadd.f32 %v915, 1.0
      %v935 = vadd.f32 %v917, 1.0
      %v936 = vadd.f32 %v919, 1.0
      %v937 = vadd.f32 %v921, 1.0
      %v938 = vrcp.pop %v922
      %v939 = vrcp.pop %v923
      %v940 = vrcp.pop %v924
      %v941 = vrcp.pop %v925
      %v942 = vrcp.pop %v926
      %v943 = vrcp.pop %v927
      %v944 = vrcp.pop %v928
      %v945 = vrcp.pop %v929
      %v946 = vrcp.pop %v930
      %v947 = vrcp.pop %v931
      %v948 = vrcp.pop %v932
      %v949 = vrcp.pop %v933
      %v950 = vrcp.pop %v934
      %v951 = vrcp.pop %v935
      %v952 = vrcp.pop %v936
      %v953 = vrcp.pop %v937
      %v954 = vlaneseq
      %v955 = vand.u32 %v954, 127
      %vm956 = vcmp.eq.s32.totalorder %v955, 1
      %v957 = vsub.f32 1.0, %v938
      %v958 = vsub.f32 1.0, %v939
      %v959 = vsub.f32 1.0, %v940
      %v960 = vsub.f32 1.0, %v941
      %v961 = vsub.f32 1.0, %v942
      %v962 = vsub.f32 1.0, %v943
      %v963 = vsub.f32 1.0, %v944
      %v964 = vsub.f32 1.0, %v945
      %v965 = vsub.f32 1.0, %v946
      %v966 = vsub.f32 1.0, %v947
      %v967 = vsub.f32 1.0, %v948
      %v968 = vsub.f32 1.0, %v949
      %v969 = vsub.f32 1.0, %v950
      %v970 = vsub.f32 1.0, %v951
      %v971 = vsub.f32 1.0, %v952
      %v972 = vsub.f32 1.0, %v953
      %974 = vset.pattern.permute.xlu0 0
      %975 = vperm.xlu0 %974, %v938
      %v976 = vpop.permute.xlu0 %975
      %979 = vset.pattern.permute.xlu0 0
      %980 = vperm.xlu0 %979, %v939
      %v981 = vpop.permute.xlu0 %980
      %984 = vset.pattern.permute.xlu0 0
      %985 = vperm.xlu0 %984, %v940
      %v986 = vpop.permute.xlu0 %985
      %989 = vset.pattern.permute.xlu0 0
      %990 = vperm.xlu0 %989, %v941
      %v991 = vpop.permute.xlu0 %990
      %994 = vset.pattern.permute.xlu0 0
      %995 = vperm.xlu0 %994, %v942
      %v996 = vpop.permute.xlu0 %995
      %999 = vset.pattern.permute.xlu0 0
      %1000 = vperm.xlu0 %999, %v943
      %v1001 = vpop.permute.xlu0 %1000
      %1004 = vset.pattern.permute.xlu0 0
      %1005 = vperm.xlu0 %1004, %v944
      %v1006 = vpop.permute.xlu0 %1005
      %1009 = vset.pattern.permute.xlu0 0
      %1010 = vperm.xlu0 %1009, %v945
      %v1011 = vpop.permute.xlu0 %1010
      %1014 = vset.pattern.permute.xlu0 0
      %1015 = vperm.xlu0 %1014, %v946
      %v1016 = vpop.permute.xlu0 %1015
      %1019 = vset.pattern.permute.xlu0 0
      %1020 = vperm.xlu0 %1019, %v947
      %v1021 = vpop.permute.xlu0 %1020
      %1024 = vset.pattern.permute.xlu0 0
      %1025 = vperm.xlu0 %1024, %v948
      %v1026 = vpop.permute.xlu0 %1025
      %1029 = vset.pattern.permute.xlu0 0
      %1030 = vperm.xlu0 %1029, %v949
      %v1031 = vpop.permute.xlu0 %1030
      %1034 = vset.pattern.permute.xlu0 0
      %1035 = vperm.xlu0 %1034, %v950
      %v1036 = vpop.permute.xlu0 %1035
      %1039 = vset.pattern.permute.xlu0 0
      %1040 = vperm.xlu0 %1039, %v951
      %v1041 = vpop.permute.xlu0 %1040
      %1044 = vset.pattern.permute.xlu0 0
      %1045 = vperm.xlu0 %1044, %v952
      %v1046 = vpop.permute.xlu0 %1045
      %1049 = vset.pattern.permute.xlu0 0
      %1050 = vperm.xlu0 %1049, %v953
      %v1051 = vpop.permute.xlu0 %1050
      %1054 = vset.pattern.permute.xlu0 0
      %1055 = vperm.xlu0 %1054, %v957
      %v1056 = vpop.permute.xlu0 %1055
      %1059 = vset.pattern.permute.xlu0 0
      %1060 = vperm.xlu0 %1059, %v958
      %v1061 = vpop.permute.xlu0 %1060
      %1064 = vset.pattern.permute.xlu0 0
      %1065 = vperm.xlu0 %1064, %v959
      %v1066 = vpop.permute.xlu0 %1065
      %1069 = vset.pattern.permute.xlu0 0
      %1070 = vperm.xlu0 %1069, %v960
      %v1071 = vpop.permute.xlu0 %1070
      %1074 = vset.pattern.permute.xlu0 0
      %1075 = vperm.xlu0 %1074, %v961
      %v1076 = vpop.permute.xlu0 %1075
      %1079 = vset.pattern.permute.xlu0 0
      %1080 = vperm.xlu0 %1079, %v962
      %v1081 = vpop.permute.xlu0 %1080
      %1084 = vset.pattern.permute.xlu0 0
      %1085 = vperm.xlu0 %1084, %v963
      %v1086 = vpop.permute.xlu0 %1085
      %1089 = vset.pattern.permute.xlu0 0
      %1090 = vperm.xlu0 %1089, %v964
      %v1091 = vpop.permute.xlu0 %1090
      %1094 = vset.pattern.permute.xlu0 0
      %1095 = vperm.xlu0 %1094, %v965
      %v1096 = vpop.permute.xlu0 %1095
      %1099 = vset.pattern.permute.xlu0 0
      %1100 = vperm.xlu0 %1099, %v966
      %v1101 = vpop.permute.xlu0 %1100
      %1104 = vset.pattern.permute.xlu0 0
      %1105 = vperm.xlu0 %1104, %v967
      %v1106 = vpop.permute.xlu0 %1105
      %1109 = vset.pattern.permute.xlu0 0
      %1110 = vperm.xlu0 %1109, %v968
      %v1111 = vpop.permute.xlu0 %1110
      %1114 = vset.pattern.permute.xlu0 0
      %1115 = vperm.xlu0 %1114, %v969
      %v1116 = vpop.permute.xlu0 %1115
      %1119 = vset.pattern.permute.xlu0 0
      %1120 = vperm.xlu0 %1119, %v970
      %v1121 = vpop.permute.xlu0 %1120
      %1124 = vset.pattern.permute.xlu0 0
      %1125 = vperm.xlu0 %1124, %v971
      %v1126 = vpop.permute.xlu0 %1125
      %1129 = vset.pattern.permute.xlu0 0
      %1130 = vperm.xlu0 %1129, %v972
      %v1131 = vpop.permute.xlu0 %1130
      %v1133 = vsel %vm956, %v976, %v1056
      %v1134 = vsel %vm956, %v981, %v1061
      %v1135 = vsel %vm956, %v986, %v1066
      %v1136 = vsel %vm956, %v991, %v1071
      %v1137 = vsel %vm956, %v996, %v1076
      %v1138 = vsel %vm956, %v1001, %v1081
      %v1139 = vsel %vm956, %v1006, %v1086
      %v1140 = vsel %vm956, %v1011, %v1091
      %v1141 = vsel %vm956, %v1016, %v1096
      %v1142 = vsel %vm956, %v1021, %v1101
      %v1143 = vsel %vm956, %v1026, %v1106
      %v1144 = vsel %vm956, %v1031, %v1111
      %v1145 = vsel %vm956, %v1036, %v1116
      %v1146 = vsel %vm956, %v1041, %v1121
      %v1147 = vsel %vm956, %v1046, %v1126
      %v1148 = vsel %vm956, %v1051, %v1131
      %vm1149 = vcmask 15360
      %1150 = vst.msk [vmem:[%s282] sm:$0xff] %vm1149, %v1133
      %1151 = vst.msk [vmem:[%s282 + $0x8] sm:$0xff] %vm1149, %v1134
      %1152 = vst.msk [vmem:[%s282 + $0x10] sm:$0xff] %vm1149, %v1135
      %1153 = vst.msk [vmem:[%s282 + $0x18] sm:$0xff] %vm1149, %v1136
      %1154 = vst.msk [vmem:[%s282 + $0x20] sm:$0xff] %vm1149, %v1137
      %1155 = vst.msk [vmem:[%s282 + $0x28] sm:$0xff] %vm1149, %v1138
      %1156 = vst.msk [vmem:[%s282 + $0x30] sm:$0xff] %vm1149, %v1139
      %1157 = vst.msk [vmem:[%s282 + $0x38] sm:$0xff] %vm1149, %v1140
      %1158 = vst.msk [vmem:[%s282 + $0x40] sm:$0xff] %vm1149, %v1141
      %1159 = vst.msk [vmem:[%s282 + $0x48] sm:$0xff] %vm1149, %v1142
      %1160 = vst.msk [vmem:[%s282 + $0x50] sm:$0xff] %vm1149, %v1143
      %1161 = vst.msk [vmem:[%s282 + $0x58] sm:$0xff] %vm1149, %v1144
      %1162 = vst.msk [vmem:[%s282 + $0x60] sm:$0xff] %vm1149, %v1145
      %1163 = vst.msk [vmem:[%s282 + $0x68] sm:$0xff] %vm1149, %v1146
      %1164 = vst.msk [vmem:[%s282 + $0x70] sm:$0xff] %vm1149, %v1147
      %1165 = vst.msk [vmem:[%s282 + $0x78] sm:$0xff] %vm1149, %v1148
      %s1166 = smul.u32 16, %s20
      %p1167 = scmp.lt.s32.totalorder %s1166, 31
      %s1168 = scalar_select %p1167, %s1166, 31
      %s1169 = smul.addr %s1168, 8
      %s1170 = scalar_lea.vmem %s7, %s1169
      // Predicated region
      $region49: #{tpu_custom_call.1} parent=47 // pred_check
        %p1171 = pneg %p190
      $region50: #{tpu_custom_call.1} parent=47 // pred_check_branch
        %1173 = sbr.rel (%p1171) target = $region52
      $region51: #{tpu_custom_call.1} parent=47 // pred_region
        %s1174 = smul.u32 16, %s20
      $region52: #{tpu_custom_call.1} parent=47 // pred_fallthru
        _
    $region48: #{tpu_custom_call.1} parent=5 // pred_fallthru
      _
    %p1175 = scmp.le.s32.totalorder 2, %s15
    // Predicated region
    $region53: #{tpu_custom_call.1} parent=5 // pred_check
      %p1176 = pneg %p1175
    $region54: #{tpu_custom_call.1} parent=5 // pred_check_branch
      %1178 = sbr.rel (%p1176) target = $region56
    $region55: #{tpu_custom_call.1} parent=5 // pred_region
      %s1179 = ssub.s32 %s15, 2
      // Predicated region
      $region57: #{tpu_custom_call.1} parent=55 // pred_check
        %p1180 = pneg %p196
      $region58: #{tpu_custom_call.1} parent=55 // pred_check_branch
        %1182 = sbr.rel (%p1180) target = $region60
      $region59: #{tpu_custom_call.1} parent=55 // pred_region
        %s1183 = smul.u32 16, %s21
        %p1184 = scmp.lt.s32.totalorder %s1183, 31
        %s1185 = scalar_select %p1184, %s1183, 31
        %s1186 = smul.addr %s1185, 8
        %s1187 = scalar_lea.vmem %s7, %s1186
      $region60: #{tpu_custom_call.1} parent=55 // pred_fallthru
        _
    $region56: #{tpu_custom_call.1} parent=5 // pred_fallthru
      _
  $region6: #{tpu_custom_call.1} parent=0 // loop_footer
    %s19 = sadd.s32 1, %s15
  $region7: #{tpu_custom_call.1} parent=0 // loop_footer_branch
    %14 = sbr.rel target = $region3
  $region8: #{tpu_custom_call.1} parent=0 // loop_exit
    _

</llo_original>
